<compile_context>
chip_gen: v7x
topology: tpu7x:2x2x1
jax: 0.10.0
libtpu: 0.0.40
codegen_flags: <defaults>
</compile_context>

<pallas_src>
import functools

import jax
import jax.numpy as jnp
from jax import lax
from jax.experimental import pallas as pl
from jax.experimental.pallas import tpu as pltpu


def _round_up(n, m):
    return ((n + m - 1) // m) * m


# ----------------------------------------------------------------------------
# Pallas kernel: whole 2-layer hypernetwork-MLP hot path for one batch tile.
#   y = (SoftExp(x @ W0x + eb0)) @ W1x + eb1          (eb_k = e_k @ W_ek + b_k)
# ----------------------------------------------------------------------------
def _iemlp_kernel(x_ref, w0_ref, eb0_ref, w1_ref, eb1_ref, alpha_ref, o_ref):
    f32 = jnp.float32
    alpha = alpha_ref[0]
    # Scalar reciprocal (guarded so alpha == 0 never divides); used as a multiply
    # inside the non-zero branches instead of a per-element vector divide.
    inv_alpha = 1.0 / jnp.where(alpha == 0.0, 1.0, alpha)

    # ---- layer 0: Linear_0( cat(x, e0) ) == x @ W0x + eb0 ----
    h_lin = jnp.dot(x_ref[...], w0_ref[...], preferred_element_type=f32) + eb0_ref[...]

    # ---- SoftExponential: only one branch executes at runtime; h stays a value
    #      (no VMEM scratch round-trip) and feeds layer 1 directly. ----
    def _nonzero(v):
        return lax.cond(
            alpha > 0.0,
            lambda u: (jnp.exp(alpha * u) - 1.0) * inv_alpha + alpha,
            lambda u: -jnp.log(1.0 - alpha * (u + alpha)) * inv_alpha,
            v,
        )

    h = lax.cond(alpha == 0.0, lambda v: v, _nonzero, h_lin)

    # ---- layer 1: Identity( Linear_1( cat(h, e1) ) ) == h @ W1x + eb1 ----
    y = jnp.dot(h, w1_ref[...], preferred_element_type=f32) + eb1_ref[...]
    o_ref[...] = y.astype(o_ref.dtype)


# ----------------------------------------------------------------------------
# Wrapper: batched (x: [B, insize]) or unbatched (x: [insize]) forward with a
# single shared interaction (i, j), as in the torch module.
# ----------------------------------------------------------------------------
@functools.partial(jax.jit, static_argnames=("tm", "tm_max"))
def interaction_embedding_mlp(x, i, j, params, *, tm=None, tm_max=1024):
    squeeze = (x.ndim == 1)
    if squeeze:
        x = x[None, :]
    x = x.astype(jnp.float32)
    b, insize = x.shape

    w0x, w0e, b0 = params["w0x"], params["w0e"], params["b0"]
    w1x, w1e, b1 = params["w1x"], params["w1e"], params["b1"]
    h0 = w0x.shape[1]
    outsize = w1x.shape[1]

    # Once-per-call embedding gather + grid-invariant bias fold (tiny XLA ops):
    #   cat(x, e) @ W + b == x @ Wx + (e @ We + b)
    idx = params["n_interactors"] * i + j
    e0 = params["emb0"][idx]                       # [E0]
    e1 = params["emb1"][idx]                       # [E1]
    eb0 = (e0 @ w0e)[None, :] + b0                 # [1, h0]
    eb1 = (e1 @ w1e)[None, :] + b1                 # [1, outsize]

    alpha = jnp.asarray(params["alpha0"], jnp.float32).reshape(1)

    # ---- tile selection (primary tuning knob) ----
    # * >= 2 tiles whenever the batch allows it so "parallel" can shard across
    #   v7x's two TensorCores; on v5e/v6e the extra grid step is negligible.
    # * capped at tm_max so per-step overhead/DMAs amortize (mem-bound roofline
    #   saturates at ~512-1024 rows); small batches pad only to 8-row sublanes.
    b8 = _round_up(b, 8)
    if tm is None:
        tm = max(8, min(tm_max, _round_up((b8 + 1) // 2, 8)))
    b_pad = _round_up(b8, tm)
    if b_pad != b:
        x = jnp.pad(x, ((0, b_pad - b), (0, 0)))
    grid = (b_pad // tm,)

    cost = pl.CostEstimate(
        flops=2 * b_pad * (insize * h0 + h0 * outsize),
        transcendentals=b_pad * h0,
        bytes_accessed=4 * (b_pad * (insize + outsize)
                            + insize * h0 + h0 * outsize + h0 + outsize + 1),
    )

    out = pl.pallas_call(
        _iemlp_kernel,
        grid=grid,
        in_specs=[
            pl.BlockSpec((tm, insize), lambda bk: (bk, 0)),          # x tile (streams)
            pl.BlockSpec((insize, h0), lambda bk: (0, 0)),           # W0x  (VMEM-resident)
            pl.BlockSpec((1, h0), lambda bk: (0, 0)),                # eb0  (resident)
            pl.BlockSpec((h0, outsize), lambda bk: (0, 0)),          # W1x  (resident)
            pl.BlockSpec((1, outsize), lambda bk: (0, 0)),           # eb1  (resident)
            pl.BlockSpec(memory_space=pltpu.MemorySpace.SMEM),       # alpha scalar
        ],
        out_specs=pl.BlockSpec((tm, outsize), lambda bk: (bk, 0)),
        out_shape=jax.ShapeDtypeStruct((b_pad, outsize), jnp.float32),
        compiler_params=pltpu.CompilerParams(dimension_semantics=("parallel",)),
        cost_estimate=cost,
    )(x, w0x, eb0, w1x, eb1, alpha)

    out = out[:b]
    return out[0] if squeeze else out


# ----------------------------------------------------------------------------
# Pure-JAX references (literal torch forward, with explicit concatenate).
# ----------------------------------------------------------------------------
def _soft_exponential_ref(x, alpha):
    a = float(alpha)
    if a == 0.0:
        return x
    if a < 0.0:
        return -jnp.log(1.0 - a * (x + a)) / a
    return (jnp.exp(a * x) - 1.0) / a + a


def reference_forward(x, i, j, params):
    """Unbatched literal forward. x: f32[insize] -> f32[outsize]."""
    idx = params["n_interactors"] * i + j
    e0 = params["emb0"][idx]
    e1 = params["emb1"][idx]
    w0 = jnp.concatenate([params["w0x"], params["w0e"]], axis=0)
    w1 = jnp.concatenate([params["w1x"], params["w1e"]], axis=0)
    h = jnp.concatenate([x, e0]) @ w0 + params["b0"][0]
    h = _soft_exponential_ref(h, params["alpha0"])
    return jnp.concatenate([h, e1]) @ w1 + params["b1"][0]


def reference_forward_batched(xb, i, j, params):
    """Batched version of the literal forward (shared (i, j))."""
    idx = params["n_interactors"] * i + j
    e0 = params["emb0"][idx]
    e1 = params["emb1"][idx]
    w0 = jnp.concatenate([params["w0x"], params["w0e"]], axis=0)
    w1 = jnp.concatenate([params["w1x"], params["w1e"]], axis=0)
    bsz = xb.shape[0]
    h = jnp.concatenate([xb, jnp.broadcast_to(e0, (bsz, e0.shape[0]))], axis=1) @ w0 + params["b0"]
    h = _soft_exponential_ref(h, params["alpha0"])
    return jnp.concatenate([h, jnp.broadcast_to(e1, (bsz, e1.shape[0]))], axis=1) @ w1 + params["b1"]


def init_params(key, insize, outsize, hsizes, n_interactors):
    assert len(hsizes) == 1, "script instantiates the default single-hidden-layer config"
    em_sizes = [hsizes[0], *hsizes]                       # [64, 64]
    h0 = hsizes[0]
    in0 = insize + em_sizes[0]                            # layer-0 fan-in (x ++ e0)
    in1 = h0 + em_sizes[1]                                # layer-1 fan-in (h ++ e1)
    n_pairs = n_interactors ** 2
    ks = jax.random.split(key, 6)
    w0 = 0.1 * jax.random.normal(ks[2], (in0, h0), jnp.float32)
    w1 = 0.1 * jax.random.normal(ks[4], (in1, outsize), jnp.float32)
    return {
        "n_interactors": n_interactors,
        "emb0": jax.random.normal(ks[0], (n_pairs, em_sizes[0]), jnp.float32),
        "emb1": jax.random.normal(ks[1], (n_pairs, em_sizes[1]), jnp.float32),
        # Weights pre-split once (concat == split matmul): no per-call slicing.
        "w0x": w0[:insize], "w0e": w0[insize:],
        "b0": 0.1 * jax.random.normal(ks[3], (1, h0), jnp.float32),
        "w1x": w1[:h0], "w1e": w1[h0:],
        "b1": 0.1 * jax.random.normal(ks[5], (1, outsize), jnp.float32),
        "alpha0": jnp.float32(0.5),    # SoftExponential learnable alpha (layer 0)
    }


if __name__ == "__main__":
    insize, outsize, hsizes, n_interactors = 32, 16, [64], 9
    batch, i, j = 256, 2, 5

    key = jax.random.PRNGKey(0)
    kx, kp = jax.random.split(key)
    xb = jax.random.normal(kx, (batch, insize), jnp.float32)
    params = init_params(kp, insize, outsize, hsizes, n_interactors)

    # Batched check for all three SoftExponential branches (alpha >0, <0, ==0).
    for a in (0.5, -0.1, 0.0):
        params["alpha0"] = jnp.float32(a)
        y = jax.block_until_ready(interaction_embedding_mlp(xb, i, j, params))
        y_ref = reference_forward_batched(xb, i, j, params)
        assert y.shape == (batch, outsize)
        assert jnp.allclose(y, y_ref, atol=1e-4, rtol=1e-4), \
            (a, float(jnp.max(jnp.abs(y - y_ref))))

    # Unbatched path (literal torch forward signature: 1-D x, scalar i, j).
    params["alpha0"] = jnp.float32(0.5)
    y1 = jax.block_until_ready(interaction_embedding_mlp(xb[0], i, j, params))
    y1_ref = reference_forward(xb[0], i, j, params)
    assert y1.shape == (outsize,)
    assert jnp.allclose(y1, y1_ref, atol=1e-4, rtol=1e-4)

    print("KERNEL_OK")
</pallas_src>

<mosaic_0001>
module attributes {stable_mosaic.version = 11 : i64} {
  func.func @_iemlp_kernel(%arg0: i32, %arg1: memref<128x32xf32, #tpu.memory_space<vmem>>, %arg2: memref<32x64xf32, #tpu.memory_space<vmem>>, %arg3: memref<1x64xf32, #tpu.memory_space<vmem>>, %arg4: memref<64x16xf32, #tpu.memory_space<vmem>>, %arg5: memref<1x16xf32, #tpu.memory_space<vmem>>, %arg6: memref<1xf32, #tpu.memory_space<smem>>, %arg7: memref<128x16xf32, #tpu.memory_space<vmem>>) attributes {dimension_semantics = [#tpu.dimension_semantics<parallel>], iteration_bounds = array<i64: 2>, scalar_prefetch = 0 : i64, scratch_operands = 0 : i64, tpu.core_type = #tpu.core_type<tc>, window_params = [{transform_indices = @transform_0, window_bounds = array<i64: 128, 32>}, {pipeline_mode = #tpu.pipeline_mode<synchronous>, transform_indices = @transform_1, window_bounds = array<i64: 32, 64>}, {pipeline_mode = #tpu.pipeline_mode<synchronous>, transform_indices = @transform_2, window_bounds = array<i64: 1, 64>}, {pipeline_mode = #tpu.pipeline_mode<synchronous>, transform_indices = @transform_3, window_bounds = array<i64: 64, 16>}, {pipeline_mode = #tpu.pipeline_mode<synchronous>, transform_indices = @transform_4, window_bounds = array<i64: 1, 16>}, {transform_indices = @transform_5, window_bounds = array<i64: 1>}, {transform_indices = @transform_6, window_bounds = array<i64: 128, 16>}]} {
    %c0 = arith.constant 0 : index
    %0 = memref.load %arg6[%c0] : memref<1xf32, #tpu.memory_space<smem>>
    %cst = arith.constant 0.000000e+00 : f32
    %1 = arith.cmpf oeq, %0, %cst : f32
    %cst_0 = arith.constant 1.000000e+00 : f32
    %2 = arith.select %1, %cst_0, %0 : f32
    %cst_1 = arith.constant 1.000000e+00 : f32
    %3 = arith.divf %cst_1, %2 : f32
    %c0_2 = arith.constant 0 : index
    %c0_3 = arith.constant 0 : index
    %4 = vector.load %arg1[%c0_2, %c0_3] : memref<128x32xf32, #tpu.memory_space<vmem>>, vector<128x32xf32>
    %c0_4 = arith.constant 0 : index
    %c0_5 = arith.constant 0 : index
    %5 = vector.load %arg2[%c0_4, %c0_5] : memref<32x64xf32, #tpu.memory_space<vmem>>, vector<32x64xf32>
    %cst_6 = arith.constant dense<0.000000e+00> : vector<128x64xf32>
    %6 = tpu.matmul %4, %5, %cst_6 {dimension_numbers = #tpu.dot_dimension_numbers<[1], [0], [0], [1], [0, 0, 1, 1], [], []>} : vector<128x32xf32>, vector<32x64xf32>, vector<128x64xf32> -> vector<128x64xf32>
    %c0_7 = arith.constant 0 : index
    %c0_8 = arith.constant 0 : index
    %7 = vector.load %arg3[%c0_7, %c0_8] : memref<1x64xf32, #tpu.memory_space<vmem>>, vector<1x64xf32>
    %8 = vector.broadcast %7 : vector<1x64xf32> to vector<128x64xf32>
    %9 = arith.addf %6, %8 : vector<128x64xf32>
    %cst_9 = arith.constant 0.000000e+00 : f32
    %10 = arith.cmpf oeq, %0, %cst_9 : f32
    %11 = arith.extui %10 : i1 to i32
    %c0_i32 = arith.constant 0 : i32
    %12 = arith.cmpi ne, %11, %c0_i32 : i32
    %13 = scf.if %12 -> (vector<128x64xf32>) {
      scf.yield %9 : vector<128x64xf32>
    } else {
      %cst_17 = arith.constant 0.000000e+00 : f32
      %20 = arith.cmpf ogt, %0, %cst_17 : f32
      %21 = arith.extui %20 : i1 to i32
      %c0_i32_18 = arith.constant 0 : i32
      %22 = arith.cmpi ne, %21, %c0_i32_18 : i32
      %23 = scf.if %22 -> (vector<128x64xf32>) {
        %24 = vector.broadcast %0 : f32 to vector<128x64xf32>
        %25 = arith.mulf %24, %9 : vector<128x64xf32>
        %26 = math.exp %25 : vector<128x64xf32>
        %cst_19 = arith.constant 1.000000e+00 : f32
        %27 = vector.broadcast %cst_19 : f32 to vector<128x64xf32>
        %28 = arith.subf %26, %27 : vector<128x64xf32>
        %29 = vector.broadcast %3 : f32 to vector<128x64xf32>
        %30 = arith.mulf %28, %29 : vector<128x64xf32>
        %31 = vector.broadcast %0 : f32 to vector<128x64xf32>
        %32 = arith.addf %30, %31 : vector<128x64xf32>
        scf.yield %32 : vector<128x64xf32>
      } else {
        %24 = vector.broadcast %0 : f32 to vector<128x64xf32>
        %25 = arith.addf %9, %24 : vector<128x64xf32>
        %26 = vector.broadcast %0 : f32 to vector<128x64xf32>
        %27 = arith.mulf %26, %25 : vector<128x64xf32>
        %cst_19 = arith.constant 1.000000e+00 : f32
        %28 = vector.broadcast %cst_19 : f32 to vector<128x64xf32>
        %29 = arith.subf %28, %27 : vector<128x64xf32>
        %30 = math.log %29 : vector<128x64xf32>
        %cst_20 = arith.constant 0.000000e+00 : f32
        %31 = vector.broadcast %cst_20 : f32 to vector<128x64xf32>
        %32 = arith.subf %31, %30 : vector<128x64xf32>
        %33 = vector.broadcast %3 : f32 to vector<128x64xf32>
        %34 = arith.mulf %32, %33 : vector<128x64xf32>
        scf.yield %34 : vector<128x64xf32>
      }
      scf.yield %23 : vector<128x64xf32>
    }
    %c0_10 = arith.constant 0 : index
    %c0_11 = arith.constant 0 : index
    %14 = vector.load %arg4[%c0_10, %c0_11] : memref<64x16xf32, #tpu.memory_space<vmem>>, vector<64x16xf32>
    %cst_12 = arith.constant dense<0.000000e+00> : vector<128x16xf32>
    %15 = tpu.matmul %13, %14, %cst_12 {dimension_numbers = #tpu.dot_dimension_numbers<[1], [0], [0], [1], [0, 0, 1, 1], [], []>} : vector<128x64xf32>, vector<64x16xf32>, vector<128x16xf32> -> vector<128x16xf32>
    %c0_13 = arith.constant 0 : index
    %c0_14 = arith.constant 0 : index
    %16 = vector.load %arg5[%c0_13, %c0_14] : memref<1x16xf32, #tpu.memory_space<vmem>>, vector<1x16xf32>
    %17 = vector.broadcast %16 : vector<1x16xf32> to vector<128x16xf32>
    %18 = arith.addf %15, %17 : vector<128x16xf32>
    %c0_15 = arith.constant 0 : index
    %c0_16 = arith.constant 0 : index
    %19 = vector.load %arg7[%c0_15, %c0_16] : memref<128x16xf32, #tpu.memory_space<vmem>>, vector<128x16xf32>
    tpu.vector_store %arg7[%c0_15, %c0_16], %18 {strides = array<i32>} : memref<128x16xf32, #tpu.memory_space<vmem>>, vector<128x16xf32>,
    return
  }
  func.func @transform_0(%arg0: i32) -> (i32, i32) {
    %c0_i32 = arith.constant 0 : i32
    %c0_i32_0 = arith.constant 0 : i32
    return %arg0, %c0_i32 : i32, i32
  }
  func.func @transform_1(%arg0: i32) -> (i32, i32) {
    %c0_i32 = arith.constant 0 : i32
    %c0_i32_0 = arith.constant 0 : i32
    %c0_i32_1 = arith.constant 0 : i32
    return %c0_i32, %c0_i32_0 : i32, i32
  }
  func.func @transform_2(%arg0: i32) -> (i32, i32) {
    %c0_i32 = arith.constant 0 : i32
    %c0_i32_0 = arith.constant 0 : i32
    %c0_i32_1 = arith.constant 0 : i32
    return %c0_i32, %c0_i32_0 : i32, i32
  }
  func.func @transform_3(%arg0: i32) -> (i32, i32) {
    %c0_i32 = arith.constant 0 : i32
    %c0_i32_0 = arith.constant 0 : i32
    %c0_i32_1 = arith.constant 0 : i32
    return %c0_i32, %c0_i32_0 : i32, i32
  }
  func.func @transform_4(%arg0: i32) -> (i32, i32) {
    %c0_i32 = arith.constant 0 : i32
    %c0_i32_0 = arith.constant 0 : i32
    %c0_i32_1 = arith.constant 0 : i32
    return %c0_i32, %c0_i32_0 : i32, i32
  }
  func.func @transform_5(%arg0: i32) -> i32 {
    %c0_i32 = arith.constant 0 : i32
    %c0_i32_0 = arith.constant 0 : i32
    return %c0_i32 : i32
  }
  func.func @transform_6(%arg0: i32) -> (i32, i32) {
    %c0_i32 = arith.constant 0 : i32
    %c0_i32_0 = arith.constant 0 : i32
    return %arg0, %c0_i32 : i32, i32
  }
}

</mosaic_0001>

<llo_original>
// kernel: interaction_embedding_mlp.1
$region0: #{interaction_embedding_mlp.1}
  #allocation0 [shape = 'u32[]', space=smem, size = 0x4, offset = 0x4, fixed_abs, tag = 'smem constant byte address 0x4 - core index']
  #allocation1 [shape = 'u32[144,128]{1,0:T(1,128)}', space=vmem, size = 0x12000, scoped, tag = 'internal scratch']
  #allocation2 [shape = 'f32[1]{0:T(128)S(6)}', space=smem, size = 0x200, scoped, tag = 'scoped memory for interaction_embedding_mlp.1']
  %s0 = inlined_call_operand.vmem [shape: f32[256,32], index: 0, kind: input, shape index: {}]
  %s1 = inlined_call_operand.vmem [shape: f32[32,64], index: 1, kind: input, shape index: {}]
  %s2 = inlined_call_operand.vmem [shape: f32[1,64], index: 2, kind: input, shape index: {}]
  %s3 = inlined_call_operand.vmem [shape: f32[64,16], index: 3, kind: input, shape index: {}]
  %s4 = inlined_call_operand.vmem [shape: f32[1,16], index: 4, kind: input, shape index: {}]
  %s5 = inlined_call_operand.<no memory space> [shape: f32[1], index: 5, kind: input, shape index: {}]
  %s6 = inlined_call_operand.vmem [shape: f32[256,16], index: 6, kind: output, shape index: {}]
  %s7 = sld [smem:[#allocation0]]
  $region73: #{interaction_embedding_mlp.1} parent=0
    _
  %s9 = ssub.s32 1, %s7
  %s10 = scalar_select 0, %s9, %s7
  %11 = sst [smem:[#allocation2]] %s5
  loop: start=0, step=1, limit=4
  $region2: #{interaction_embedding_mlp.1} parent=0 // loop_pre_header
    _
  $region3: #{interaction_embedding_mlp.1} parent=0 // loop_header
    %s13 = sphi 0, %s17
    %p14 = scmp.ge.s32.totalorder %s13, 4
    %s23 = sphi 0, %s25
    %s26 = sphi 0, %s23
    %s27 = sphi 0, %s26
    %s43 = sphi 0, %s27
    %s47 = sphi 0, %s47
    %s49 = sphi 0, %s47
    %s50 = sphi 0, %s49
    %s64 = sphi 0, %s50
    %s68 = sphi 0, %s68
    %s70 = sphi 0, %s68
    %s71 = sphi 0, %s70
    %s85 = sphi 0, %s71
    %s89 = sphi 0, %s89
    %s91 = sphi 0, %s89
    %s92 = sphi 0, %s91
    %s106 = sphi 0, %s92
    %s110 = sphi 0, %s110
    %s112 = sphi 0, %s110
    %s113 = sphi 0, %s112
    %s127 = sphi 0, %s113
    %s131 = sphi 0, %s131
    %s133 = sphi 0, %s131
    %s134 = sphi 0, %s133
    %s148 = sphi 0, %s134
    %s154 = sphi 0, %s156
    %s157 = sphi 0, %s154
    %s158 = sphi 0, %s157
    %s174 = sphi 0, %s158
  $region4: #{interaction_embedding_mlp.1} parent=0 // loop_header_branch
    %16 = sbr.rel (%p14) target = $region8
  $region5: #{interaction_embedding_mlp.1} parent=0 // loop_body
    %s18 = ssub.s32 %s13, 1
    %s19 = ssub.s32 %s13, 2
    %s20 = sadd.s32 %s13, 1
    %s21 = ssub.s32 %s13, %s20
    %p22 = scmp.eq.s32.totalorder %s21, 0
    %s24 = sadd.s32 %s23, 1
    %s25 = scalar_select %p22, %s23, %s24
    %p28 = pneg %p22
    %p29 = scmp.eq.s32.totalorder %s13, 1
    %p30 = por %p28, %p29
    %p31 = scmp.ne.s32.totalorder %s23, %s26
    %p32 = scmp.eq.s32.totalorder %s13, 0
    %p33 = por %p31, %p32
    %p34 = scmp.ne.s32.totalorder %s23, %s26
    %p35 = scmp.eq.s32.totalorder %s18, 1
    %p36 = por %p34, %p35
    %p37 = scmp.ne.s32.totalorder %s26, %s27
    %p38 = scmp.eq.s32.totalorder %s18, 0
    %p39 = por %p37, %p38
    %p40 = scmp.ne.s32.totalorder %s26, %s27
    %p41 = scmp.eq.s32.totalorder %s19, 1
    %p42 = por %p40, %p41
    %p44 = scmp.ne.s32.totalorder %s27, %s43
    %p45 = scmp.eq.s32.totalorder %s19, 0
    %p46 = por %p44, %p45
    %s48 = sadd.s32 %s47, 1
    %p51 = scmp.eq.s32.totalorder %s13, 1
    %p52 = scmp.ne.s32.totalorder %s47, %s49
    %p53 = scmp.eq.s32.totalorder %s13, 0
    %p54 = por %p52, %p53
    %p55 = scmp.ne.s32.totalorder %s47, %s49
    %p56 = scmp.eq.s32.totalorder %s18, 1
    %p57 = por %p55, %p56
    %p58 = scmp.ne.s32.totalorder %s49, %s50
    %p59 = scmp.eq.s32.totalorder %s18, 0
    %p60 = por %p58, %p59
    %p61 = scmp.ne.s32.totalorder %s49, %s50
    %p62 = scmp.eq.s32.totalorder %s19, 1
    %p63 = por %p61, %p62
    %p65 = scmp.ne.s32.totalorder %s50, %s64
    %p66 = scmp.eq.s32.totalorder %s19, 0
    %p67 = por %p65, %p66
    %s69 = sadd.s32 %s68, 1
    %p72 = scmp.eq.s32.totalorder %s13, 1
    %p73 = scmp.ne.s32.totalorder %s68, %s70
    %p74 = scmp.eq.s32.totalorder %s13, 0
    %p75 = por %p73, %p74
    %p76 = scmp.ne.s32.totalorder %s68, %s70
    %p77 = scmp.eq.s32.totalorder %s18, 1
    %p78 = por %p76, %p77
    %p79 = scmp.ne.s32.totalorder %s70, %s71
    %p80 = scmp.eq.s32.totalorder %s18, 0
    %p81 = por %p79, %p80
    %p82 = scmp.ne.s32.totalorder %s70, %s71
    %p83 = scmp.eq.s32.totalorder %s19, 1
    %p84 = por %p82, %p83
    %p86 = scmp.ne.s32.totalorder %s71, %s85
    %p87 = scmp.eq.s32.totalorder %s19, 0
    %p88 = por %p86, %p87
    %s90 = sadd.s32 %s89, 1
    %p93 = scmp.eq.s32.totalorder %s13, 1
    %p94 = scmp.ne.s32.totalorder %s89, %s91
    %p95 = scmp.eq.s32.totalorder %s13, 0
    %p96 = por %p94, %p95
    %p97 = scmp.ne.s32.totalorder %s89, %s91
    %p98 = scmp.eq.s32.totalorder %s18, 1
    %p99 = por %p97, %p98
    %p100 = scmp.ne.s32.totalorder %s91, %s92
    %p101 = scmp.eq.s32.totalorder %s18, 0
    %p102 = por %p100, %p101
    %p103 = scmp.ne.s32.totalorder %s91, %s92
    %p104 = scmp.eq.s32.totalorder %s19, 1
    %p105 = por %p103, %p104
    %p107 = scmp.ne.s32.totalorder %s92, %s106
    %p108 = scmp.eq.s32.totalorder %s19, 0
    %p109 = por %p107, %p108
    %s111 = sadd.s32 %s110, 1
    %p114 = scmp.eq.s32.totalorder %s13, 1
    %p115 = scmp.ne.s32.totalorder %s110, %s112
    %p116 = scmp.eq.s32.totalorder %s13, 0
    %p117 = por %p115, %p116
    %p118 = scmp.ne.s32.totalorder %s110, %s112
    %p119 = scmp.eq.s32.totalorder %s18, 1
    %p120 = por %p118, %p119
    %p121 = scmp.ne.s32.totalorder %s112, %s113
    %p122 = scmp.eq.s32.totalorder %s18, 0
    %p123 = por %p121, %p122
    %p124 = scmp.ne.s32.totalorder %s112, %s113
    %p125 = scmp.eq.s32.totalorder %s19, 1
    %p126 = por %p124, %p125
    %p128 = scmp.ne.s32.totalorder %s113, %s127
    %p129 = scmp.eq.s32.totalorder %s19, 0
    %p130 = por %p128, %p129
    %s132 = sadd.s32 %s131, 1
    %p135 = scmp.eq.s32.totalorder %s13, 1
    %p136 = scmp.ne.s32.totalorder %s131, %s133
    %p137 = scmp.eq.s32.totalorder %s13, 0
    %p138 = por %p136, %p137
    %p139 = scmp.ne.s32.totalorder %s131, %s133
    %p140 = scmp.eq.s32.totalorder %s18, 1
    %p141 = por %p139, %p140
    %p142 = scmp.ne.s32.totalorder %s133, %s134
    %p143 = scmp.eq.s32.totalorder %s18, 0
    %p144 = por %p142, %p143
    %p145 = scmp.ne.s32.totalorder %s133, %s134
    %p146 = scmp.eq.s32.totalorder %s19, 1
    %p147 = por %p145, %p146
    %p149 = scmp.ne.s32.totalorder %s134, %s148
    %p150 = scmp.eq.s32.totalorder %s19, 0
    %p151 = por %p149, %p150
    %s152 = ssub.s32 %s13, %s20
    %p153 = scmp.eq.s32.totalorder %s152, 0
    %s155 = sadd.s32 %s154, 1
    %s156 = scalar_select %p153, %s154, %s155
    %p159 = pneg %p153
    %p160 = scmp.eq.s32.totalorder %s13, 1
    %p161 = por %p159, %p160
    %p162 = scmp.ne.s32.totalorder %s154, %s157
    %p163 = scmp.eq.s32.totalorder %s13, 0
    %p164 = por %p162, %p163
    %p165 = scmp.ne.s32.totalorder %s154, %s157
    %p166 = scmp.eq.s32.totalorder %s18, 1
    %p167 = por %p165, %p166
    %p168 = scmp.ne.s32.totalorder %s157, %s158
    %p169 = scmp.eq.s32.totalorder %s18, 0
    %p170 = por %p168, %p169
    %p171 = scmp.ne.s32.totalorder %s157, %s158
    %p172 = scmp.eq.s32.totalorder %s19, 1
    %p173 = por %p171, %p172
    %p175 = scmp.ne.s32.totalorder %s158, %s174
    %p176 = scmp.eq.s32.totalorder %s19, 0
    %p177 = por %p175, %p176
    %p178 = scmp.le.s32.totalorder 1, %s13
    %p179 = scmp.lt.s32.totalorder %s13, 3
    %p180 = pnand %p178, %p179
    %p181 = pneg %p180
    // Predicated region
    $region9: #{interaction_embedding_mlp.1} parent=5 // pred_check
      _
    $region10: #{interaction_embedding_mlp.1} parent=5 // pred_check_branch
      %183 = sbr.rel (%p180) target = $region12
    $region11: #{interaction_embedding_mlp.1} parent=5 // pred_region
      %s184 = ssub.s32 %s13, 1
      // Predicated region
      $region13: #{interaction_embedding_mlp.1} parent=11 // pred_check
        %p185 = pneg %p60
      $region14: #{interaction_embedding_mlp.1} parent=11 // pred_check_branch
        %187 = sbr.rel (%p185) target = $region16
      $region15: #{interaction_embedding_mlp.1} parent=11 // pred_region
        _
      $region16: #{interaction_embedding_mlp.1} parent=11 // pred_fallthru
        _
      // Predicated region
      $region17: #{interaction_embedding_mlp.1} parent=11 // pred_check
        %p188 = pneg %p81
      $region18: #{interaction_embedding_mlp.1} parent=11 // pred_check_branch
        %190 = sbr.rel (%p188) target = $region20
      $region19: #{interaction_embedding_mlp.1} parent=11 // pred_region
        _
      $region20: #{interaction_embedding_mlp.1} parent=11 // pred_fallthru
        _
      // Predicated region
      $region21: #{interaction_embedding_mlp.1} parent=11 // pred_check
        %p191 = pneg %p102
      $region22: #{interaction_embedding_mlp.1} parent=11 // pred_check_branch
        %193 = sbr.rel (%p191) target = $region24
      $region23: #{interaction_embedding_mlp.1} parent=11 // pred_region
        _
      $region24: #{interaction_embedding_mlp.1} parent=11 // pred_fallthru
        _
      // Predicated region
      $region25: #{interaction_embedding_mlp.1} parent=11 // pred_check
        %p194 = pneg %p123
      $region26: #{interaction_embedding_mlp.1} parent=11 // pred_check_branch
        %196 = sbr.rel (%p194) target = $region28
      $region27: #{interaction_embedding_mlp.1} parent=11 // pred_region
        _
      $region28: #{interaction_embedding_mlp.1} parent=11 // pred_fallthru
        _
      // Predicated region
      $region29: #{interaction_embedding_mlp.1} parent=11 // pred_check
        %p197 = pneg %p144
      $region30: #{interaction_embedding_mlp.1} parent=11 // pred_check_branch
        %199 = sbr.rel (%p197) target = $region32
      $region31: #{interaction_embedding_mlp.1} parent=11 // pred_region
        _
      $region32: #{interaction_embedding_mlp.1} parent=11 // pred_fallthru
        _
    $region12: #{interaction_embedding_mlp.1} parent=5 // pred_fallthru
      _
    %p200 = scmp.lt.s32.totalorder %s13, 2
    // Predicated region
    $region33: #{interaction_embedding_mlp.1} parent=5 // pred_check
      %p201 = pneg %p200
    $region34: #{interaction_embedding_mlp.1} parent=5 // pred_check_branch
      %203 = sbr.rel (%p201) target = $region36
    $region35: #{interaction_embedding_mlp.1} parent=5 // pred_region
      // Predicated region
      $region37: #{interaction_embedding_mlp.1} parent=35 // pred_check
        %p204 = pneg %p33
      $region38: #{interaction_embedding_mlp.1} parent=35 // pred_check_branch
        %206 = sbr.rel (%p204) target = $region40
      $region39: #{interaction_embedding_mlp.1} parent=35 // pred_region
        %s207 = smul.u32 16, %s13
        %p208 = scmp.lt.s32.totalorder %s207, 31
        %s209 = scalar_select %p208, %s207, 31
        %s210 = smul.addr %s209, 8
        %s211 = scalar_lea.vmem %s0, %s210
        %s212 = smul.u32 16, %s13
      $region40: #{interaction_embedding_mlp.1} parent=35 // pred_fallthru
        _
    $region36: #{interaction_embedding_mlp.1} parent=5 // pred_fallthru
      _
    %p213 = scmp.le.s32.totalorder 1, %s13
    %p214 = scmp.lt.s32.totalorder %s13, 3
    %p215 = pnand %p213, %p214
    %p216 = pneg %p215
    // Predicated region
    $region41: #{interaction_embedding_mlp.1} parent=5 // pred_check
      _
    $region42: #{interaction_embedding_mlp.1} parent=5 // pred_check_branch
      %218 = sbr.rel (%p215) target = $region44
    $region43: #{interaction_embedding_mlp.1} parent=5 // pred_region
      %s219 = ssub.s32 %s13, 1
      %s220 = smul.u32 16, %s18
      %p221 = scmp.lt.s32.totalorder %s220, 31
      %s222 = scalar_select %p221, %s220, 31
      %s223 = smul.addr %s222, 8
      %s224 = scalar_lea.vmem %s0, %s223
      %p225 = pneg %p39
      %p226 = pneg %p36
      %p227 = pneg %p60
      %p228 = pneg %p57
      %p229 = pneg %p81
      %p230 = pneg %p78
      %p231 = pneg %p102
      %p232 = pneg %p99
      %p233 = pneg %p123
      %p234 = pneg %p120
      %p235 = pneg %p144
      %p236 = pneg %p141
      %p237 = pneg %p170
      %p238 = pneg %p167
      %s239 = smul.u32 16, %s18
      %p240 = scmp.lt.s32.totalorder %s239, 31
      %s241 = scalar_select %p240, %s239, 31
      %s242 = smul.addr %s241, 8
      %s243 = scalar_lea.vmem %s6, %s242
      %s244 = smul.u32 16, %s18
      %p245 = scmp.lt.s32.totalorder %s244, 31
      %s246 = scalar_select %p245, %s244, 31
      %s247 = smul.addr %s246, 8
      %s248 = scalar_lea.vmem %s0, %s247
      %s249 = smul.u32 16, %s18
      %s250 = smul.u32 16, %s18
      %p251 = scmp.lt.s32.totalorder %s250, 31
      %s252 = scalar_select %p251, %s250, 31
      %s253 = smul.addr %s252, 8
      %s254 = scalar_lea.vmem %s6, %s253
      %s255 = smul.u32 16, %s18
      %s256 = sld [smem:[#allocation2]]
      %p257 = scmp.eq.f32.partialorder %s256, 0.0
      %s258 = scalar_select %p257, 1.0, %s256
      %v259 = vstv %s258
      %v260 = vrcp.pop %v259
      %s261 = vtos %v260
      %v262 = vld [vmem:[%s248] sm:$0xff]
      %v263 = vld [vmem:[%s248 + $0x8] sm:$0xff]
      %v264 = vld [vmem:[%s248 + $0x10] sm:$0xff]
      %v265 = vld [vmem:[%s248 + $0x18] sm:$0xff]
      %v266 = vld [vmem:[%s248 + $0x20] sm:$0xff]
      %v267 = vld [vmem:[%s248 + $0x28] sm:$0xff]
      %v268 = vld [vmem:[%s248 + $0x30] sm:$0xff]
      %v269 = vld [vmem:[%s248 + $0x38] sm:$0xff]
      %v270 = vld [vmem:[%s248 + $0x40] sm:$0xff]
      %v271 = vld [vmem:[%s248 + $0x48] sm:$0xff]
      %v272 = vld [vmem:[%s248 + $0x50] sm:$0xff]
      %v273 = vld [vmem:[%s248 + $0x58] sm:$0xff]
      %v274 = vld [vmem:[%s248 + $0x60] sm:$0xff]
      %v275 = vld [vmem:[%s248 + $0x68] sm:$0xff]
      %v276 = vld [vmem:[%s248 + $0x70] sm:$0xff]
      %v277 = vld [vmem:[%s248 + $0x78] sm:$0xff]
      %v278 = vld [vmem:[%s1] sm:$0xff]
      %v279 = vld [vmem:[%s1 + $0x8] sm:$0xff]
      %v280 = vld [vmem:[%s1 + $0x10] sm:$0xff]
      %v281 = vld [vmem:[%s1 + $0x18] sm:$0xff]
      %v282 = vld [vmem:[%s2] sm:$0x1]
      %v284 = vlaneseq
      %v285 = vshrl.u32 %v284, 7
      %v286 = vsub.s32 0, %v285
      %v287 = vrot.slane %v282, %v286
      %vm289 = vcmask 261120
      %v291 = vsel %vm289, %v262, 0
      %v294 = vsel %vm289, %v263, 0
      %v297 = vsel %vm289, %v264, 0
      %v300 = vsel %vm289, %v265, 0
      %v303 = vsel %vm289, %v266, 0
      %v306 = vsel %vm289, %v267, 0
      %v309 = vsel %vm289, %v268, 0
      %v312 = vsel %vm289, %v269, 0
      %v315 = vsel %vm289, %v270, 0
      %v318 = vsel %vm289, %v271, 0
      %v321 = vsel %vm289, %v272, 0
      %v324 = vsel %vm289, %v273, 0
      %v327 = vsel %vm289, %v274, 0
      %v330 = vsel %vm289, %v275, 0
      %v333 = vsel %vm289, %v276, 0
      %v336 = vsel %vm289, %v277, 0
      %338 = vmatprep.subr.mxu0 0.0
      %339 = vmatpush1.msra.mxu0 %v278
      %340 = vmatprep.subr.mxu0 0.0
      %341 = vmatpush1.msra.mxu0 %v279
      %342 = vmatprep.subr.mxu0 0.0
      %343 = vmatpush1.msra.mxu0 %v280
      %344 = vmatprep.subr.mxu0 0.0
      %345 = vmatpush1.msra.mxu0 %v281
      %346 = vmatprep.subr.mxu0 0.0
      %347 = vmatpush1.msra.mxu0 0.0
      %348 = vmatprep.subr.mxu0 0.0
      %349 = vmatpush1.msra.mxu0 0.0
      %350 = vmatprep.subr.mxu0 0.0
      %351 = vmatpush1.msra.mxu0 0.0
      %352 = vmatprep.subr.mxu0 0.0
      %353 = vmatpush1.msra.mxu0 0.0
      %354 = vmatprep.subr.mxu0 0.0
      %355 = vmatpush1.msra.mxu0 0.0
      %356 = vmatprep.subr.mxu0 0.0
      %357 = vmatpush1.msra.mxu0 0.0
      %358 = vmatprep.subr.mxu0 0.0
      %359 = vmatpush1.msra.mxu0 0.0
      %360 = vmatprep.subr.mxu0 0.0
      %361 = vmatpush1.msra.mxu0 0.0
      %362 = vmatprep.subr.mxu0 0.0
      %363 = vmatpush1.msra.mxu0 0.0
      %364 = vmatprep.subr.mxu0 0.0
      %365 = vmatpush1.msra.mxu0 0.0
      %366 = vmatprep.subr.mxu0 0.0
      %367 = vmatpush1.msra.mxu0 0.0
      %368 = vmatprep.subr.mxu0 0.0
      %369 = vmatpush1.msra.mxu0 0.0
      %370 = vmatprep.subr.mxu0 0.0
      %371 = vmatpush1.msra.mxu0 0.0
      %372 = vmatprep.subr.mxu0 0.0
      %373 = vmatpush1.msra.mxu0 0.0
      %374 = vmatprep.subr.mxu0 0.0
      %375 = vmatpush1.msra.mxu0 0.0
      %376 = vmatprep.subr.mxu0 0.0
      %377 = vmatpush1.msra.mxu0 0.0
      %378 = vmatprep.subr.mxu0 0.0
      %379 = vmatpush1.msra.mxu0 0.0
      %380 = vmatprep.subr.mxu0 0.0
      %381 = vmatpush1.msra.mxu0 0.0
      %382 = vmatprep.subr.mxu0 0.0
      %383 = vmatpush1.msra.mxu0 0.0
      %384 = vmatprep.subr.mxu0 0.0
      %385 = vmatpush1.msra.mxu0 0.0
      %386 = vmatprep.subr.mxu0 0.0
      %387 = vmatpush1.msra.mxu0 0.0
      %388 = vmatprep.subr.mxu0 0.0
      %389 = vmatpush1.msra.mxu0 0.0
      %390 = vmatprep.subr.mxu0 0.0
      %391 = vmatpush1.msra.mxu0 0.0
      %392 = vmatprep.subr.mxu0 0.0
      %393 = vmatpush1.msra.mxu0 0.0
      %394 = vmatprep.subr.mxu0 0.0
      %395 = vmatpush1.msra.mxu0 0.0
      %396 = vmatprep.subr.mxu0 0.0
      %397 = vmatpush1.msra.mxu0 0.0
      %398 = vmatprep.subr.mxu0 0.0
      %399 = vmatpush1.msra.mxu0 0.0
      %400 = vmatprep.subr.mxu0 0.0
      %401 = vmatpush1.msra.mxu0 0.0
      %402 = vmatprep.mubr.f32.mxu0 0.0
      %403 = vmatmul.mubr.f32.gmra.mrb[0].mxu0 %v291
      %v404 = vpop.f32.mrb[0].mxu0
      %v405 = vadd.f32 %v287, %v404
      %v406 = vpop.f32.mrb[0].mxu0
      %407 = vmatprep.mubr.f32.mxu0 0.0
      %408 = vmatmul.mubr.f32.gmra.mrb[0].mxu0 %v294
      %v409 = vpop.f32.mrb[0].mxu0
      %v410 = vadd.f32 %v287, %v409
      %v411 = vpop.f32.mrb[0].mxu0
      %412 = vmatprep.mubr.f32.mxu0 0.0
      %413 = vmatmul.mubr.f32.gmra.mrb[0].mxu0 %v297
      %v414 = vpop.f32.mrb[0].mxu0
      %v415 = vadd.f32 %v287, %v414
      %v416 = vpop.f32.mrb[0].mxu0
      %417 = vmatprep.mubr.f32.mxu0 0.0
      %418 = vmatmul.mubr.f32.gmra.mrb[0].mxu0 %v300
      %v419 = vpop.f32.mrb[0].mxu0
      %v420 = vadd.f32 %v287, %v419
      %v421 = vpop.f32.mrb[0].mxu0
      %422 = vmatprep.mubr.f32.mxu0 0.0
      %423 = vmatmul.mubr.f32.gmra.mrb[0].mxu0 %v303
      %v424 = vpop.f32.mrb[0].mxu0
      %v425 = vadd.f32 %v287, %v424
      %v426 = vpop.f32.mrb[0].mxu0
      %427 = vmatprep.mubr.f32.mxu0 0.0
      %428 = vmatmul.mubr.f32.gmra.mrb[0].mxu0 %v306
      %v429 = vpop.f32.mrb[0].mxu0
      %v430 = vadd.f32 %v287, %v429
      %v431 = vpop.f32.mrb[0].mxu0
      %432 = vmatprep.mubr.f32.mxu0 0.0
      %433 = vmatmul.mubr.f32.gmra.mrb[0].mxu0 %v309
      %v434 = vpop.f32.mrb[0].mxu0
      %v435 = vadd.f32 %v287, %v434
      %v436 = vpop.f32.mrb[0].mxu0
      %437 = vmatprep.mubr.f32.mxu0 0.0
      %438 = vmatmul.mubr.f32.gmra.mrb[0].mxu0 %v312
      %v439 = vpop.f32.mrb[0].mxu0
      %v440 = vadd.f32 %v287, %v439
      %v441 = vpop.f32.mrb[0].mxu0
      %442 = vmatprep.mubr.f32.mxu0 0.0
      %443 = vmatmul.mubr.f32.gmra.mrb[0].mxu0 %v315
      %v444 = vpop.f32.mrb[0].mxu0
      %v445 = vadd.f32 %v287, %v444
      %v446 = vpop.f32.mrb[0].mxu0
      %447 = vmatprep.mubr.f32.mxu0 0.0
      %448 = vmatmul.mubr.f32.gmra.mrb[0].mxu0 %v318
      %v449 = vpop.f32.mrb[0].mxu0
      %v450 = vadd.f32 %v287, %v449
      %v451 = vpop.f32.mrb[0].mxu0
      %452 = vmatprep.mubr.f32.mxu0 0.0
      %453 = vmatmul.mubr.f32.gmra.mrb[0].mxu0 %v321
      %v454 = vpop.f32.mrb[0].mxu0
      %v455 = vadd.f32 %v287, %v454
      %v456 = vpop.f32.mrb[0].mxu0
      %457 = vmatprep.mubr.f32.mxu0 0.0
      %458 = vmatmul.mubr.f32.gmra.mrb[0].mxu0 %v324
      %v459 = vpop.f32.mrb[0].mxu0
      %v460 = vadd.f32 %v287, %v459
      %v461 = vpop.f32.mrb[0].mxu0
      %462 = vmatprep.mubr.f32.mxu0 0.0
      %463 = vmatmul.mubr.f32.gmra.mrb[0].mxu0 %v327
      %v464 = vpop.f32.mrb[0].mxu0
      %v465 = vadd.f32 %v287, %v464
      %v466 = vpop.f32.mrb[0].mxu0
      %467 = vmatprep.mubr.f32.mxu0 0.0
      %468 = vmatmul.mubr.f32.gmra.mrb[0].mxu0 %v330
      %v469 = vpop.f32.mrb[0].mxu0
      %v470 = vadd.f32 %v287, %v469
      %v471 = vpop.f32.mrb[0].mxu0
      %472 = vmatprep.mubr.f32.mxu0 0.0
      %473 = vmatmul.mubr.f32.gmra.mrb[0].mxu0 %v333
      %v474 = vpop.f32.mrb[0].mxu0
      %v475 = vadd.f32 %v287, %v474
      %v476 = vpop.f32.mrb[0].mxu0
      %477 = vmatprep.mubr.f32.mxu0 0.0
      %478 = vmatmul.mubr.f32.gmra.mrb[0].mxu0 %v336
      %v479 = vpop.f32.mrb[0].mxu0
      %v480 = vadd.f32 %v287, %v479
      %v481 = vpop.f32.mrb[0].mxu0
      %482 = vdwg.mxu0
      // Predicated region
      $region45: #{interaction_embedding_mlp.1} parent=43 // pred_check
        %p483 = pneg %p257
      $region46: #{interaction_embedding_mlp.1} parent=43 // pred_check_branch
        %485 = sbr.rel (%p483) target = $region48
      $region47: #{interaction_embedding_mlp.1} parent=43 // pred_region
        _
      $region48: #{interaction_embedding_mlp.1} parent=43 // pred_fallthru
        _
      %p486 = pneg %p257
      // Predicated region
      $region49: #{interaction_embedding_mlp.1} parent=43 // pred_check
        _
      $region50: #{interaction_embedding_mlp.1} parent=43 // pred_check_branch
        %488 = sbr.rel (%p257) target = $region52
      $region51: #{interaction_embedding_mlp.1} parent=43 // pred_region
        %p489 = scmp.gt.f32.partialorder %s256, 0.0
        // Predicated region
        $region53: #{interaction_embedding_mlp.1} parent=51 // pred_check
          %p490 = pneg %p489
        $region54: #{interaction_embedding_mlp.1} parent=51 // pred_check_branch
          %492 = sbr.rel (%p490) target = $region56
        $region55: #{interaction_embedding_mlp.1} parent=51 // pred_region
          %v493 = vstv %s256
          %v494 = vmul.f32 %v493, %v405
          %v495 = vmul.f32 %v493, %v410
          %v496 = vmul.f32 %v493, %v415
          %v497 = vmul.f32 %v493, %v420
          %v498 = vmul.f32 %v493, %v425
          %v499 = vmul.f32 %v493, %v430
          %v500 = vmul.f32 %v493, %v435
          %v501 = vmul.f32 %v493, %v440
          %v502 = vmul.f32 %v493, %v445
          %v503 = vmul.f32 %v493, %v450
          %v504 = vmul.f32 %v493, %v455
          %v505 = vmul.f32 %v493, %v460
          %v506 = vmul.f32 %v493, %v465
          %v507 = vmul.f32 %v493, %v470
          %v508 = vmul.f32 %v493, %v475
          %v509 = vmul.f32 %v493, %v480
          %v510 = vmul.f32 %v494, 1.442695
          %v511 = vpow.pop %v510
          %v512 = vmul.f32 %v495, 1.442695
          %v513 = vpow.pop %v512
          %v514 = vmul.f32 %v496, 1.442695
          %v515 = vpow.pop %v514
          %v516 = vmul.f32 %v497, 1.442695
          %v517 = vpow.pop %v516
          %v518 = vmul.f32 %v498, 1.442695
          %v519 = vpow.pop %v518
          %v520 = vmul.f32 %v499, 1.442695
          %v521 = vpow.pop %v520
          %v522 = vmul.f32 %v500, 1.442695
          %v523 = vpow.pop %v522
          %v524 = vmul.f32 %v501, 1.442695
          %v525 = vpow.pop %v524
          %v526 = vmul.f32 %v502, 1.442695
          %v527 = vpow.pop %v526
          %v528 = vmul.f32 %v503, 1.442695
          %v529 = vpow.pop %v528
          %v530 = vmul.f32 %v504, 1.442695
          %v531 = vpow.pop %v530
          %v532 = vmul.f32 %v505, 1.442695
          %v533 = vpow.pop %v532
          %v534 = vmul.f32 %v506, 1.442695
          %v535 = vpow.pop %v534
          %v536 = vmul.f32 %v507, 1.442695
          %v537 = vpow.pop %v536
          %v538 = vmul.f32 %v508, 1.442695
          %v539 = vpow.pop %v538
          %v540 = vmul.f32 %v509, 1.442695
          %v541 = vpow.pop %v540
          %v542 = vsub.f32 %v511, 1.0
          %v543 = vsub.f32 %v513, 1.0
          %v544 = vsub.f32 %v515, 1.0
          %v545 = vsub.f32 %v517, 1.0
          %v546 = vsub.f32 %v519, 1.0
          %v547 = vsub.f32 %v521, 1.0
          %v548 = vsub.f32 %v523, 1.0
          %v549 = vsub.f32 %v525, 1.0
          %v550 = vsub.f32 %v527, 1.0
          %v551 = vsub.f32 %v529, 1.0
          %v552 = vsub.f32 %v531, 1.0
          %v553 = vsub.f32 %v533, 1.0
          %v554 = vsub.f32 %v535, 1.0
          %v555 = vsub.f32 %v537, 1.0
          %v556 = vsub.f32 %v539, 1.0
          %v557 = vsub.f32 %v541, 1.0
          %v558 = vstv %s261
          %v559 = vmul.f32 %v542, %v558
          %v560 = vmul.f32 %v543, %v558
          %v561 = vmul.f32 %v544, %v558
          %v562 = vmul.f32 %v545, %v558
          %v563 = vmul.f32 %v546, %v558
          %v564 = vmul.f32 %v547, %v558
          %v565 = vmul.f32 %v548, %v558
          %v566 = vmul.f32 %v549, %v558
          %v567 = vmul.f32 %v550, %v558
          %v568 = vmul.f32 %v551, %v558
          %v569 = vmul.f32 %v552, %v558
          %v570 = vmul.f32 %v553, %v558
          %v571 = vmul.f32 %v554, %v558
          %v572 = vmul.f32 %v555, %v558
          %v573 = vmul.f32 %v556, %v558
          %v574 = vmul.f32 %v557, %v558
          %v575 = vadd.f32 %v559, %v493
          %v576 = vadd.f32 %v560, %v493
          %v577 = vadd.f32 %v561, %v493
          %v578 = vadd.f32 %v562, %v493
          %v579 = vadd.f32 %v563, %v493
          %v580 = vadd.f32 %v564, %v493
          %v581 = vadd.f32 %v565, %v493
          %v582 = vadd.f32 %v566, %v493
          %v583 = vadd.f32 %v567, %v493
          %v584 = vadd.f32 %v568, %v493
          %v585 = vadd.f32 %v569, %v493
          %v586 = vadd.f32 %v570, %v493
          %v587 = vadd.f32 %v571, %v493
          %v588 = vadd.f32 %v572, %v493
          %v589 = vadd.f32 %v573, %v493
          %v590 = vadd.f32 %v574, %v493
        $region56: #{interaction_embedding_mlp.1} parent=51 // pred_fallthru
          %v591 = vphi 0, %v575
          %v592 = vphi 0, %v576
          %v593 = vphi 0, %v577
          %v594 = vphi 0, %v578
          %v595 = vphi 0, %v579
          %v596 = vphi 0, %v580
          %v597 = vphi 0, %v581
          %v598 = vphi 0, %v582
          %v599 = vphi 0, %v583
          %v600 = vphi 0, %v584
          %v601 = vphi 0, %v585
          %v602 = vphi 0, %v586
          %v603 = vphi 0, %v587
          %v604 = vphi 0, %v588
          %v605 = vphi 0, %v589
          %v606 = vphi 0, %v590
        %p607 = pneg %p489
        // Predicated region
        $region57: #{interaction_embedding_mlp.1} parent=51 // pred_check
          _
        $region58: #{interaction_embedding_mlp.1} parent=51 // pred_check_branch
          %609 = sbr.rel (%p489) target = $region60
        $region59: #{interaction_embedding_mlp.1} parent=51 // pred_region
          %v610 = vstv %s256
          %v611 = vadd.f32 %v405, %v610
          %v612 = vadd.f32 %v410, %v610
          %v613 = vadd.f32 %v415, %v610
          %v614 = vadd.f32 %v420, %v610
          %v615 = vadd.f32 %v425, %v610
          %v616 = vadd.f32 %v430, %v610
          %v617 = vadd.f32 %v435, %v610
          %v618 = vadd.f32 %v440, %v610
          %v619 = vadd.f32 %v445, %v610
          %v620 = vadd.f32 %v450, %v610
          %v621 = vadd.f32 %v455, %v610
          %v622 = vadd.f32 %v460, %v610
          %v623 = vadd.f32 %v465, %v610
          %v624 = vadd.f32 %v470, %v610
          %v625 = vadd.f32 %v475, %v610
          %v626 = vadd.f32 %v480, %v610
          %v627 = vmul.f32 %v610, %v611
          %v628 = vmul.f32 %v610, %v612
          %v629 = vmul.f32 %v610, %v613
          %v630 = vmul.f32 %v610, %v614
          %v631 = vmul.f32 %v610, %v615
          %v632 = vmul.f32 %v610, %v616
          %v633 = vmul.f32 %v610, %v617
          %v634 = vmul.f32 %v610, %v618
          %v635 = vmul.f32 %v610, %v619
          %v636 = vmul.f32 %v610, %v620
          %v637 = vmul.f32 %v610, %v621
          %v638 = vmul.f32 %v610, %v622
          %v639 = vmul.f32 %v610, %v623
          %v640 = vmul.f32 %v610, %v624
          %v641 = vmul.f32 %v610, %v625
          %v642 = vmul.f32 %v610, %v626
          %v643 = vsub.f32 1.0, %v627
          %v644 = vsub.f32 1.0, %v628
          %v645 = vsub.f32 1.0, %v629
          %v646 = vsub.f32 1.0, %v630
          %v647 = vsub.f32 1.0, %v631
          %v648 = vsub.f32 1.0, %v632
          %v649 = vsub.f32 1.0, %v633
          %v650 = vsub.f32 1.0, %v634
          %v651 = vsub.f32 1.0, %v635
          %v652 = vsub.f32 1.0, %v636
          %v653 = vsub.f32 1.0, %v637
          %v654 = vsub.f32 1.0, %v638
          %v655 = vsub.f32 1.0, %v639
          %v656 = vsub.f32 1.0, %v640
          %v657 = vsub.f32 1.0, %v641
          %v658 = vsub.f32 1.0, %v642
          %v659 = vlog2.pop %v643
          %v660 = vmul.f32 %v659, 0.6931472
          %v661 = vlog2.pop %v644
          %v662 = vmul.f32 %v661, 0.6931472
          %v663 = vlog2.pop %v645
          %v664 = vmul.f32 %v663, 0.6931472
          %v665 = vlog2.pop %v646
          %v666 = vmul.f32 %v665, 0.6931472
          %v667 = vlog2.pop %v647
          %v668 = vmul.f32 %v667, 0.6931472
          %v669 = vlog2.pop %v648
          %v670 = vmul.f32 %v669, 0.6931472
          %v671 = vlog2.pop %v649
          %v672 = vmul.f32 %v671, 0.6931472
          %v673 = vlog2.pop %v650
          %v674 = vmul.f32 %v673, 0.6931472
          %v675 = vlog2.pop %v651
          %v676 = vmul.f32 %v675, 0.6931472
          %v677 = vlog2.pop %v652
          %v678 = vmul.f32 %v677, 0.6931472
          %v679 = vlog2.pop %v653
          %v680 = vmul.f32 %v679, 0.6931472
          %v681 = vlog2.pop %v654
          %v682 = vmul.f32 %v681, 0.6931472
          %v683 = vlog2.pop %v655
          %v684 = vmul.f32 %v683, 0.6931472
          %v685 = vlog2.pop %v656
          %v686 = vmul.f32 %v685, 0.6931472
          %v687 = vlog2.pop %v657
          %v688 = vmul.f32 %v687, 0.6931472
          %v689 = vlog2.pop %v658
          %v690 = vmul.f32 %v689, 0.6931472
          %v691 = vsub.f32 0.0, %v660
          %v692 = vsub.f32 0.0, %v662
          %v693 = vsub.f32 0.0, %v664
          %v694 = vsub.f32 0.0, %v666
          %v695 = vsub.f32 0.0, %v668
          %v696 = vsub.f32 0.0, %v670
          %v697 = vsub.f32 0.0, %v672
          %v698 = vsub.f32 0.0, %v674
          %v699 = vsub.f32 0.0, %v676
          %v700 = vsub.f32 0.0, %v678
          %v701 = vsub.f32 0.0, %v680
          %v702 = vsub.f32 0.0, %v682
          %v703 = vsub.f32 0.0, %v684
          %v704 = vsub.f32 0.0, %v686
          %v705 = vsub.f32 0.0, %v688
          %v706 = vsub.f32 0.0, %v690
          %v707 = vstv %s261
          %v708 = vmul.f32 %v691, %v707
          %v709 = vmul.f32 %v692, %v707
          %v710 = vmul.f32 %v693, %v707
          %v711 = vmul.f32 %v694, %v707
          %v712 = vmul.f32 %v695, %v707
          %v713 = vmul.f32 %v696, %v707
          %v714 = vmul.f32 %v697, %v707
          %v715 = vmul.f32 %v698, %v707
          %v716 = vmul.f32 %v699, %v707
          %v717 = vmul.f32 %v700, %v707
          %v718 = vmul.f32 %v701, %v707
          %v719 = vmul.f32 %v702, %v707
          %v720 = vmul.f32 %v703, %v707
          %v721 = vmul.f32 %v704, %v707
          %v722 = vmul.f32 %v705, %v707
          %v723 = vmul.f32 %v706, %v707
        $region60: #{interaction_embedding_mlp.1} parent=51 // pred_fallthru
          %v724 = vphi %v591, %v708
          %v725 = vphi %v592, %v709
          %v726 = vphi %v593, %v710
          %v727 = vphi %v594, %v711
          %v728 = vphi %v595, %v712
          %v729 = vphi %v596, %v713
          %v730 = vphi %v597, %v714
          %v731 = vphi %v598, %v715
          %v732 = vphi %v599, %v716
          %v733 = vphi %v600, %v717
          %v734 = vphi %v601, %v718
          %v735 = vphi %v602, %v719
          %v736 = vphi %v603, %v720
          %v737 = vphi %v604, %v721
          %v738 = vphi %v605, %v722
          %v739 = vphi %v606, %v723
      $region52: #{interaction_embedding_mlp.1} parent=43 // pred_fallthru
        %v740 = vphi %v405, %v724
        %v741 = vphi %v410, %v725
        %v742 = vphi %v415, %v726
        %v743 = vphi %v420, %v727
        %v744 = vphi %v425, %v728
        %v745 = vphi %v430, %v729
        %v746 = vphi %v435, %v730
        %v747 = vphi %v440, %v731
        %v748 = vphi %v445, %v732
        %v749 = vphi %v450, %v733
        %v750 = vphi %v455, %v734
        %v751 = vphi %v460, %v735
        %v752 = vphi %v465, %v736
        %v753 = vphi %v470, %v737
        %v754 = vphi %v475, %v738
        %v755 = vphi %v480, %v739
      %v756 = vld [vmem:[%s3] sm:$0xff]
      %v757 = vld [vmem:[%s3 + $0x8] sm:$0xff]
      %v758 = vld [vmem:[%s3 + $0x10] sm:$0xff]
      %v759 = vld [vmem:[%s3 + $0x18] sm:$0xff]
      %v760 = vld [vmem:[%s3 + $0x20] sm:$0xff]
      %v761 = vld [vmem:[%s3 + $0x28] sm:$0xff]
      %v762 = vld [vmem:[%s3 + $0x30] sm:$0xff]
      %v763 = vld [vmem:[%s3 + $0x38] sm:$0xff]
      %v764 = vld [vmem:[%s4] sm:$0x1]
      %v766 = vlaneseq
      %v767 = vshrl.u32 %v766, 7
      %v768 = vsub.s32 0, %v767
      %v769 = vrot.slane %v764, %v768
      %vm771 = vcmask 523264
      %v773 = vsel %vm771, %v740, 0
      %v776 = vsel %vm771, %v741, 0
      %v779 = vsel %vm771, %v742, 0
      %v782 = vsel %vm771, %v743, 0
      %v785 = vsel %vm771, %v744, 0
      %v788 = vsel %vm771, %v745, 0
      %v791 = vsel %vm771, %v746, 0
      %v794 = vsel %vm771, %v747, 0
      %v797 = vsel %vm771, %v748, 0
      %v800 = vsel %vm771, %v749, 0
      %v803 = vsel %vm771, %v750, 0
      %v806 = vsel %vm771, %v751, 0
      %v809 = vsel %vm771, %v752, 0
      %v812 = vsel %vm771, %v753, 0
      %v815 = vsel %vm771, %v754, 0
      %v818 = vsel %vm771, %v755, 0
      %820 = vmatprep.subr.mxu0 0.0
      %821 = vmatpush1.msra.mxu0 %v756
      %822 = vmatprep.subr.mxu0 0.0
      %823 = vmatpush1.msra.mxu0 %v757
      %824 = vmatprep.subr.mxu0 0.0
      %825 = vmatpush1.msra.mxu0 %v758
      %826 = vmatprep.subr.mxu0 0.0
      %827 = vmatpush1.msra.mxu0 %v759
      %828 = vmatprep.subr.mxu0 0.0
      %829 = vmatpush1.msra.mxu0 %v760
      %830 = vmatprep.subr.mxu0 0.0
      %831 = vmatpush1.msra.mxu0 %v761
      %832 = vmatprep.subr.mxu0 0.0
      %833 = vmatpush1.msra.mxu0 %v762
      %834 = vmatprep.subr.mxu0 0.0
      %835 = vmatpush1.msra.mxu0 %v763
      %836 = vmatprep.subr.mxu0 0.0
      %837 = vmatpush1.msra.mxu0 0.0
      %838 = vmatprep.subr.mxu0 0.0
      %839 = vmatpush1.msra.mxu0 0.0
      %840 = vmatprep.subr.mxu0 0.0
      %841 = vmatpush1.msra.mxu0 0.0
      %842 = vmatprep.subr.mxu0 0.0
      %843 = vmatpush1.msra.mxu0 0.0
      %844 = vmatprep.subr.mxu0 0.0
      %845 = vmatpush1.msra.mxu0 0.0
      %846 = vmatprep.subr.mxu0 0.0
      %847 = vmatpush1.msra.mxu0 0.0
      %848 = vmatprep.subr.mxu0 0.0
      %849 = vmatpush1.msra.mxu0 0.0
      %850 = vmatprep.subr.mxu0 0.0
      %851 = vmatpush1.msra.mxu0 0.0
      %852 = vmatprep.subr.mxu0 0.0
      %853 = vmatpush1.msra.mxu0 0.0
      %854 = vmatprep.subr.mxu0 0.0
      %855 = vmatpush1.msra.mxu0 0.0
      %856 = vmatprep.subr.mxu0 0.0
      %857 = vmatpush1.msra.mxu0 0.0
      %858 = vmatprep.subr.mxu0 0.0
      %859 = vmatpush1.msra.mxu0 0.0
      %860 = vmatprep.subr.mxu0 0.0
      %861 = vmatpush1.msra.mxu0 0.0
      %862 = vmatprep.subr.mxu0 0.0
      %863 = vmatpush1.msra.mxu0 0.0
      %864 = vmatprep.subr.mxu0 0.0
      %865 = vmatpush1.msra.mxu0 0.0
      %866 = vmatprep.subr.mxu0 0.0
      %867 = vmatpush1.msra.mxu0 0.0
      %868 = vmatprep.subr.mxu0 0.0
      %869 = vmatpush1.msra.mxu0 0.0
      %870 = vmatprep.subr.mxu0 0.0
      %871 = vmatpush1.msra.mxu0 0.0
      %872 = vmatprep.subr.mxu0 0.0
      %873 = vmatpush1.msra.mxu0 0.0
      %874 = vmatprep.subr.mxu0 0.0
      %875 = vmatpush1.msra.mxu0 0.0
      %876 = vmatprep.subr.mxu0 0.0
      %877 = vmatpush1.msra.mxu0 0.0
      %878 = vmatprep.subr.mxu0 0.0
      %879 = vmatpush1.msra.mxu0 0.0
      %880 = vmatprep.subr.mxu0 0.0
      %881 = vmatpush1.msra.mxu0 0.0
      %882 = vmatprep.subr.mxu0 0.0
      %883 = vmatpush1.msra.mxu0 0.0
      %884 = vmatprep.mubr.f32.mxu0 0.0
      %885 = vmatmul.mubr.f32.gmra.mrb[0].mxu0 %v773
      %v886 = vpop.f32.mrb[0].mxu0
      %v887 = vadd.f32 %v769, %v886
      %v888 = vpop.f32.mrb[0].mxu0
      %889 = vmatprep.mubr.f32.mxu0 0.0
      %890 = vmatmul.mubr.f32.gmra.mrb[0].mxu0 %v776
      %v891 = vpop.f32.mrb[0].mxu0
      %v892 = vadd.f32 %v769, %v891
      %v893 = vpop.f32.mrb[0].mxu0
      %894 = vmatprep.mubr.f32.mxu0 0.0
      %895 = vmatmul.mubr.f32.gmra.mrb[0].mxu0 %v779
      %v896 = vpop.f32.mrb[0].mxu0
      %v897 = vadd.f32 %v769, %v896
      %v898 = vpop.f32.mrb[0].mxu0
      %899 = vmatprep.mubr.f32.mxu0 0.0
      %900 = vmatmul.mubr.f32.gmra.mrb[0].mxu0 %v782
      %v901 = vpop.f32.mrb[0].mxu0
      %v902 = vadd.f32 %v769, %v901
      %v903 = vpop.f32.mrb[0].mxu0
      %904 = vmatprep.mubr.f32.mxu0 0.0
      %905 = vmatmul.mubr.f32.gmra.mrb[0].mxu0 %v785
      %v906 = vpop.f32.mrb[0].mxu0
      %v907 = vadd.f32 %v769, %v906
      %v908 = vpop.f32.mrb[0].mxu0
      %909 = vmatprep.mubr.f32.mxu0 0.0
      %910 = vmatmul.mubr.f32.gmra.mrb[0].mxu0 %v788
      %v911 = vpop.f32.mrb[0].mxu0
      %v912 = vadd.f32 %v769, %v911
      %v913 = vpop.f32.mrb[0].mxu0
      %914 = vmatprep.mubr.f32.mxu0 0.0
      %915 = vmatmul.mubr.f32.gmra.mrb[0].mxu0 %v791
      %v916 = vpop.f32.mrb[0].mxu0
      %v917 = vadd.f32 %v769, %v916
      %v918 = vpop.f32.mrb[0].mxu0
      %919 = vmatprep.mubr.f32.mxu0 0.0
      %920 = vmatmul.mubr.f32.gmra.mrb[0].mxu0 %v794
      %v921 = vpop.f32.mrb[0].mxu0
      %v922 = vadd.f32 %v769, %v921
      %v923 = vpop.f32.mrb[0].mxu0
      %924 = vmatprep.mubr.f32.mxu0 0.0
      %925 = vmatmul.mubr.f32.gmra.mrb[0].mxu0 %v797
      %v926 = vpop.f32.mrb[0].mxu0
      %v927 = vadd.f32 %v769, %v926
      %v928 = vpop.f32.mrb[0].mxu0
      %929 = vmatprep.mubr.f32.mxu0 0.0
      %930 = vmatmul.mubr.f32.gmra.mrb[0].mxu0 %v800
      %v931 = vpop.f32.mrb[0].mxu0
      %v932 = vadd.f32 %v769, %v931
      %v933 = vpop.f32.mrb[0].mxu0
      %934 = vmatprep.mubr.f32.mxu0 0.0
      %935 = vmatmul.mubr.f32.gmra.mrb[0].mxu0 %v803
      %v936 = vpop.f32.mrb[0].mxu0
      %v937 = vadd.f32 %v769, %v936
      %v938 = vpop.f32.mrb[0].mxu0
      %939 = vmatprep.mubr.f32.mxu0 0.0
      %940 = vmatmul.mubr.f32.gmra.mrb[0].mxu0 %v806
      %v941 = vpop.f32.mrb[0].mxu0
      %v942 = vadd.f32 %v769, %v941
      %v943 = vpop.f32.mrb[0].mxu0
      %944 = vmatprep.mubr.f32.mxu0 0.0
      %945 = vmatmul.mubr.f32.gmra.mrb[0].mxu0 %v809
      %v946 = vpop.f32.mrb[0].mxu0
      %v947 = vadd.f32 %v769, %v946
      %v948 = vpop.f32.mrb[0].mxu0
      %949 = vmatprep.mubr.f32.mxu0 0.0
      %950 = vmatmul.mubr.f32.gmra.mrb[0].mxu0 %v812
      %v951 = vpop.f32.mrb[0].mxu0
      %v952 = vadd.f32 %v769, %v951
      %v953 = vpop.f32.mrb[0].mxu0
      %954 = vmatprep.mubr.f32.mxu0 0.0
      %955 = vmatmul.mubr.f32.gmra.mrb[0].mxu0 %v815
      %v956 = vpop.f32.mrb[0].mxu0
      %v957 = vadd.f32 %v769, %v956
      %v958 = vpop.f32.mrb[0].mxu0
      %959 = vmatprep.mubr.f32.mxu0 0.0
      %960 = vmatmul.mubr.f32.gmra.mrb[0].mxu0 %v818
      %v961 = vpop.f32.mrb[0].mxu0
      %v962 = vadd.f32 %v769, %v961
      %v963 = vpop.f32.mrb[0].mxu0
      %964 = vdwg.mxu0
      %vm965 = vcmask 130048
      %966 = vst.msk [vmem:[%s254] sm:$0xff] %vm965, %v887
      %967 = vst.msk [vmem:[%s254 + $0x8] sm:$0xff] %vm965, %v892
      %968 = vst.msk [vmem:[%s254 + $0x10] sm:$0xff] %vm965, %v897
      %969 = vst.msk [vmem:[%s254 + $0x18] sm:$0xff] %vm965, %v902
      %970 = vst.msk [vmem:[%s254 + $0x20] sm:$0xff] %vm965, %v907
      %971 = vst.msk [vmem:[%s254 + $0x28] sm:$0xff] %vm965, %v912
      %972 = vst.msk [vmem:[%s254 + $0x30] sm:$0xff] %vm965, %v917
      %973 = vst.msk [vmem:[%s254 + $0x38] sm:$0xff] %vm965, %v922
      %974 = vst.msk [vmem:[%s254 + $0x40] sm:$0xff] %vm965, %v927
      %975 = vst.msk [vmem:[%s254 + $0x48] sm:$0xff] %vm965, %v932
      %976 = vst.msk [vmem:[%s254 + $0x50] sm:$0xff] %vm965, %v937
      %977 = vst.msk [vmem:[%s254 + $0x58] sm:$0xff] %vm965, %v942
      %978 = vst.msk [vmem:[%s254 + $0x60] sm:$0xff] %vm965, %v947
      %979 = vst.msk [vmem:[%s254 + $0x68] sm:$0xff] %vm965, %v952
      %980 = vst.msk [vmem:[%s254 + $0x70] sm:$0xff] %vm965, %v957
      %981 = vst.msk [vmem:[%s254 + $0x78] sm:$0xff] %vm965, %v962
      %s982 = smul.u32 16, %s18
      %p983 = scmp.lt.s32.totalorder %s982, 31
      %s984 = scalar_select %p983, %s982, 31
      %s985 = smul.addr %s984, 8
      %s986 = scalar_lea.vmem %s6, %s985
      // Predicated region
      $region61: #{interaction_embedding_mlp.1} parent=43 // pred_check
        %p987 = pneg %p167
      $region62: #{interaction_embedding_mlp.1} parent=43 // pred_check_branch
        %989 = sbr.rel (%p987) target = $region64
      $region63: #{interaction_embedding_mlp.1} parent=43 // pred_region
        %s990 = smul.u32 16, %s18
      $region64: #{interaction_embedding_mlp.1} parent=43 // pred_fallthru
        _
    $region44: #{interaction_embedding_mlp.1} parent=5 // pred_fallthru
      _
    %p991 = scmp.le.s32.totalorder 2, %s13
    // Predicated region
    $region65: #{interaction_embedding_mlp.1} parent=5 // pred_check
      %p992 = pneg %p991
    $region66: #{interaction_embedding_mlp.1} parent=5 // pred_check_branch
      %994 = sbr.rel (%p992) target = $region68
    $region67: #{interaction_embedding_mlp.1} parent=5 // pred_region
      %s995 = ssub.s32 %s13, 2
      // Predicated region
      $region69: #{interaction_embedding_mlp.1} parent=67 // pred_check
        %p996 = pneg %p173
      $region70: #{interaction_embedding_mlp.1} parent=67 // pred_check_branch
        %998 = sbr.rel (%p996) target = $region72
      $region71: #{interaction_embedding_mlp.1} parent=67 // pred_region
        %s999 = smul.u32 16, %s19
        %p1000 = scmp.lt.s32.totalorder %s999, 31
        %s1001 = scalar_select %p1000, %s999, 31
        %s1002 = smul.addr %s1001, 8
        %s1003 = scalar_lea.vmem %s6, %s1002
      $region72: #{interaction_embedding_mlp.1} parent=67 // pred_fallthru
        _
    $region68: #{interaction_embedding_mlp.1} parent=5 // pred_fallthru
      _
  $region6: #{interaction_embedding_mlp.1} parent=0 // loop_footer
    %s17 = sadd.s32 1, %s13
  $region7: #{interaction_embedding_mlp.1} parent=0 // loop_footer_branch
    %12 = sbr.rel target = $region3
  $region8: #{interaction_embedding_mlp.1} parent=0 // loop_exit
    _

</llo_original>
